<compile_context>
chip_gen: v7x
topology: tpu7x:2x2x1
jax: 0.10.0
libtpu: 0.0.40
codegen_flags: <defaults>
</compile_context>

<pallas_src>
import functools

import jax
import jax.numpy as jnp
from jax.experimental import pallas as pl
from jax.experimental.pallas import tpu as pltpu


def _round_up(x, m):
    return ((x + m - 1) // m) * m


def _gcn_kernel(x_ref, w_ref, b_ref, o_ref, xt_ref, *, assemble_in_vmem):
    # x_ref : (1, C_in, tile_t, V)   NCHW input block, native layout (no HBM transpose)
    # w_ref : (C_in*V, C_out*V)      fused conv+adjacency operator, rows = (ci, v)
    # b_ref : (1, C_out*V)           fused bias, cols = (c, w)
    # o_ref : (1, C_out, tile_t, V)  NCHW output block, native layout
    # xt_ref: (tile_t, C_in*V)       VMEM scratch (used only on the fallback path)
    C_in = x_ref.shape[1]
    V = x_ref.shape[3]
    C_out = o_ref.shape[1]

    if assemble_in_vmem:
        # Fallback: assemble (tile_t, C_in*V) with masked stores into scratch.
        for ci in range(C_in):
            xt_ref[:, ci * V:(ci + 1) * V] = x_ref[0, ci]
        xt = xt_ref[...]
    else:
        # Preferred: lane-concat in registers (XLU work, hidden under DMA slack).
        xt = jnp.concatenate([x_ref[0, ci] for ci in range(C_in)], axis=-1)

    # Single MXU matmul: (tile_t, C_in*V) @ (C_in*V, C_out*V), f32 accumulation.
    acc = jnp.dot(xt, w_ref[...], preferred_element_type=jnp.float32) + b_ref[...]

    # Scatter the (c, w) columns back into the NCHW output block.
    for c in range(C_out):
        o_ref[0, c] = acc[:, c * V:(c + 1) * V].astype(o_ref.dtype)


def _pick_tile_t(N, T, target):
    """T-tile: multiple of 8 (or == T), <= target; split so the grid has >= 4
    steps when cheaply possible (keeps both v7x TensorCores busy)."""
    if T <= 8:
        return T
    tile = T if T <= target else max(8, (target // 8) * 8)
    while N * pl.cdiv(T, tile) < 4 and tile >= 16:
        tile = max(8, _round_up(pl.cdiv(tile, 2), 8))
    return min(tile, T)


@functools.partial(jax.jit, static_argnames=("tile_t_target", "assemble_in_vmem"))
def gcn_forward(x, conv_w, conv_b, adj, *, tile_t_target=1024, assemble_in_vmem=False):
    """x: (N, C_in, T, V); conv_w: (K*C_out, C_in, 1, 1); conv_b: (K*C_out,);
    adj: (K, V, V).  Returns (N, C_out, T, V)."""
    N, C_in, T, V = x.shape
    K = adj.shape[0]
    KC = conv_w.shape[0]
    assert KC % K == 0
    C_out = KC // K

    # ---- one-time fused operator (tiny) ----
    #   W_big[(ci*V + v), (c*V + w)] = sum_k conv_w[k*C_out + c, ci] * adj[k, v, w]
    #   b_eff[(c*V + w)]             = sum_{k,v} conv_b[k*C_out + c] * adj[k, v, w]
    w_kci = conv_w.reshape(K, C_out, C_in).astype(jnp.float32)
    adj_f = adj.astype(jnp.float32)
    w_big = jnp.einsum('kci,kvw->ivcw', w_kci, adj_f).reshape(C_in * V, C_out * V)
    b_eff = jnp.einsum('kc,kvw->cw',
                       conv_b.reshape(K, C_out).astype(jnp.float32),
                       adj_f).reshape(1, C_out * V)

    tile_t = _pick_tile_t(N, T, tile_t_target)
    grid = (N, pl.cdiv(T, tile_t))

    # VMEM budget: double-buffered NCHW blocks (minor dim V lane-pads to 128),
    # the tiny operator, and the scratch row buffer.  Capped at 32 MiB (v7x-safe).
    vp = _round_up(V, 128)
    tp = _round_up(tile_t, 8)
    per_step = (C_in + C_out) * tp * vp * 4
    scratch_bytes = tp * _round_up(C_in * V, 128) * 4
    vmem_limit = int(min(32 * 1024 * 1024,
                         max(16 * 1024 * 1024,
                             3 * per_step + scratch_bytes + (1 << 20))))

    kernel = functools.partial(_gcn_kernel, assemble_in_vmem=assemble_in_vmem)

    return pl.pallas_call(
        kernel,
        out_shape=jax.ShapeDtypeStruct((N, C_out, T, V), x.dtype),
        grid_spec=pltpu.PrefetchScalarGridSpec(
            num_scalar_prefetch=0,
            grid=grid,
            in_specs=[
                pl.BlockSpec((1, C_in, tile_t, V), lambda n, t: (n, 0, t, 0)),
                pl.BlockSpec((C_in * V, C_out * V), lambda n, t: (0, 0)),
                pl.BlockSpec((1, C_out * V), lambda n, t: (0, 0)),
            ],
            out_specs=pl.BlockSpec((1, C_out, tile_t, V), lambda n, t: (n, 0, t, 0)),
            scratch_shapes=[pltpu.VMEM((tile_t, C_in * V), jnp.float32)],
        ),
        compiler_params=pltpu.CompilerParams(
            dimension_semantics=("parallel", "parallel"),
            vmem_limit_bytes=vmem_limit,
        ),
    )(x, w_big, b_eff)


def gcn_reference(x_nchw, conv_w, conv_b, adj):
    """Pure-JAX reference matching the PyTorch forward."""
    N, C_in, T, V = x_nchw.shape
    K = adj.shape[0]
    KC = conv_w.shape[0]
    C_out = KC // K
    y = jnp.einsum('nctv,oc->notv', x_nchw, conv_w.reshape(KC, C_in)) \
        + conv_b[None, :, None, None]
    y = y.reshape(N, K, C_out, T, V)
    return jnp.einsum('nkctv,kvw->nctw', y, adj)


if __name__ == "__main__":
    key = jax.random.PRNGKey(0)
    k_x, k_w, k_b, k_a = jax.random.split(key, 4)

    # Small shapes consistent with the module.
    N, C_in, T, V = 2, 4, 16, 16
    C_out, K = 8, 3

    x = jax.random.normal(k_x, (N, C_in, T, V), dtype=jnp.float32)
    conv_w = jax.random.normal(k_w, (C_out * K, C_in, 1, 1), dtype=jnp.float32) * 0.1
    conv_b = jax.random.normal(k_b, (C_out * K,), dtype=jnp.float32) * 0.1
    adj = jax.random.uniform(k_a, (K, V, V), dtype=jnp.float32)

    try:
        out = jax.block_until_ready(gcn_forward(x, conv_w, conv_b, adj))
    except Exception:
        # Robust fallback: build the matmul operand via VMEM scratch stores
        # instead of a register lane-concat (identical math, always lowers).
        out = jax.block_until_ready(
            gcn_forward(x, conv_w, conv_b, adj, assemble_in_vmem=True))

    ref = gcn_reference(x, conv_w, conv_b, adj)
    assert out.shape == (N, C_out, T, V)
    assert jnp.allclose(out, ref, atol=1e-4, rtol=1e-4), \
        float(jnp.max(jnp.abs(out - ref)))

    print("KERNEL_OK")
</pallas_src>

<mosaic_0001>
module attributes {stable_mosaic.version = 11 : i64} {
  func.func @_gcn_kernel(%arg0: i32, %arg1: i32, %arg2: memref<1x4x8x16xf32, #tpu.memory_space<vmem>>, %arg3: memref<64x128xf32, #tpu.memory_space<vmem>>, %arg4: memref<1x128xf32, #tpu.memory_space<vmem>>, %arg5: memref<1x8x8x16xf32, #tpu.memory_space<vmem>>, %arg6: memref<8x64xf32, #tpu.memory_space<vmem>>) attributes {dimension_semantics = [#tpu.dimension_semantics<parallel>, #tpu.dimension_semantics<parallel>], iteration_bounds = array<i64: 2, 2>, scalar_prefetch = 0 : i64, scratch_operands = 1 : i64, tpu.core_type = #tpu.core_type<tc>, window_params = [{transform_indices = @transform_0, window_bounds = array<i64: 1, 4, 8, 16>}, {pipeline_mode = #tpu.pipeline_mode<synchronous>, transform_indices = @transform_1, window_bounds = array<i64: 64, 128>}, {pipeline_mode = #tpu.pipeline_mode<synchronous>, transform_indices = @transform_2, window_bounds = array<i64: 1, 128>}, {transform_indices = @transform_3, window_bounds = array<i64: 1, 8, 8, 16>}]} {
    %c0 = arith.constant 0 : index
    %c0_0 = arith.constant 0 : index
    %c0_1 = arith.constant 0 : index
    %c0_2 = arith.constant 0 : index
    %0 = vector.load %arg2[%c0, %c0_0, %c0_1, %c0_2] : memref<1x4x8x16xf32, #tpu.memory_space<vmem>>, vector<1x1x8x16xf32>
    %1 = vector.shape_cast %0 : vector<1x1x8x16xf32> to vector<8x16xf32>
    %c0_3 = arith.constant 0 : index
    %c1 = arith.constant 1 : index
    %c0_4 = arith.constant 0 : index
    %c0_5 = arith.constant 0 : index
    %2 = vector.load %arg2[%c0_3, %c1, %c0_4, %c0_5] : memref<1x4x8x16xf32, #tpu.memory_space<vmem>>, vector<1x1x8x16xf32>
    %3 = vector.shape_cast %2 : vector<1x1x8x16xf32> to vector<8x16xf32>
    %c0_6 = arith.constant 0 : index
    %c2 = arith.constant 2 : index
    %c0_7 = arith.constant 0 : index
    %c0_8 = arith.constant 0 : index
    %4 = vector.load %arg2[%c0_6, %c2, %c0_7, %c0_8] : memref<1x4x8x16xf32, #tpu.memory_space<vmem>>, vector<1x1x8x16xf32>
    %5 = vector.shape_cast %4 : vector<1x1x8x16xf32> to vector<8x16xf32>
    %c0_9 = arith.constant 0 : index
    %c3 = arith.constant 3 : index
    %c0_10 = arith.constant 0 : index
    %c0_11 = arith.constant 0 : index
    %6 = vector.load %arg2[%c0_9, %c3, %c0_10, %c0_11] : memref<1x4x8x16xf32, #tpu.memory_space<vmem>>, vector<1x1x8x16xf32>
    %7 = vector.shape_cast %6 : vector<1x1x8x16xf32> to vector<8x16xf32>
    %8 = tpu.concatenate %1, %3, %5, %7 in 1 : vector<8x16xf32>, vector<8x16xf32>, vector<8x16xf32>, vector<8x16xf32> -> vector<8x64xf32>
    %c0_12 = arith.constant 0 : index
    %c0_13 = arith.constant 0 : index
    %9 = vector.load %arg3[%c0_12, %c0_13] : memref<64x128xf32, #tpu.memory_space<vmem>>, vector<64x128xf32>
    %cst = arith.constant dense<0.000000e+00> : vector<8x128xf32>
    %10 = tpu.matmul %8, %9, %cst {dimension_numbers = #tpu.dot_dimension_numbers<[1], [0], [0], [1], [0, 0, 1, 1], [], []>} : vector<8x64xf32>, vector<64x128xf32>, vector<8x128xf32> -> vector<8x128xf32>
    %c0_14 = arith.constant 0 : index
    %c0_15 = arith.constant 0 : index
    %11 = vector.load %arg4[%c0_14, %c0_15] : memref<1x128xf32, #tpu.memory_space<vmem>>, vector<1x128xf32>
    %12 = vector.broadcast %11 : vector<1x128xf32> to vector<8x128xf32>
    %13 = arith.addf %10, %12 : vector<8x128xf32>
    %14 = vector.extract_strided_slice %13 {offsets = [0, 0], sizes = [8, 16], strides = [1, 1]} : vector<8x128xf32> to vector<8x16xf32>
    %c0_16 = arith.constant 0 : index
    %c0_17 = arith.constant 0 : index
    %c0_18 = arith.constant 0 : index
    %c0_19 = arith.constant 0 : index
    %15 = vector.load %arg5[%c0_16, %c0_17, %c0_18, %c0_19] : memref<1x8x8x16xf32, #tpu.memory_space<vmem>>, vector<1x1x8x16xf32>
    %16 = vector.shape_cast %15 : vector<1x1x8x16xf32> to vector<8x16xf32>
    %17 = vector.shape_cast %14 : vector<8x16xf32> to vector<1x1x8x16xf32>
    tpu.vector_store %arg5[%c0_16, %c0_17, %c0_18, %c0_19], %17 {strides = array<i32>} : memref<1x8x8x16xf32, #tpu.memory_space<vmem>>, vector<1x1x8x16xf32>,
    %18 = vector.extract_strided_slice %13 {offsets = [0, 16], sizes = [8, 16], strides = [1, 1]} : vector<8x128xf32> to vector<8x16xf32>
    %c0_20 = arith.constant 0 : index
    %c1_21 = arith.constant 1 : index
    %c0_22 = arith.constant 0 : index
    %c0_23 = arith.constant 0 : index
    %19 = vector.load %arg5[%c0_20, %c1_21, %c0_22, %c0_23] : memref<1x8x8x16xf32, #tpu.memory_space<vmem>>, vector<1x1x8x16xf32>
    %20 = vector.shape_cast %19 : vector<1x1x8x16xf32> to vector<8x16xf32>
    %21 = vector.shape_cast %18 : vector<8x16xf32> to vector<1x1x8x16xf32>
    tpu.vector_store %arg5[%c0_20, %c1_21, %c0_22, %c0_23], %21 {strides = array<i32>} : memref<1x8x8x16xf32, #tpu.memory_space<vmem>>, vector<1x1x8x16xf32>,
    %22 = vector.extract_strided_slice %13 {offsets = [0, 32], sizes = [8, 16], strides = [1, 1]} : vector<8x128xf32> to vector<8x16xf32>
    %c0_24 = arith.constant 0 : index
    %c2_25 = arith.constant 2 : index
    %c0_26 = arith.constant 0 : index
    %c0_27 = arith.constant 0 : index
    %23 = vector.load %arg5[%c0_24, %c2_25, %c0_26, %c0_27] : memref<1x8x8x16xf32, #tpu.memory_space<vmem>>, vector<1x1x8x16xf32>
    %24 = vector.shape_cast %23 : vector<1x1x8x16xf32> to vector<8x16xf32>
    %25 = vector.shape_cast %22 : vector<8x16xf32> to vector<1x1x8x16xf32>
    tpu.vector_store %arg5[%c0_24, %c2_25, %c0_26, %c0_27], %25 {strides = array<i32>} : memref<1x8x8x16xf32, #tpu.memory_space<vmem>>, vector<1x1x8x16xf32>,
    %26 = vector.extract_strided_slice %13 {offsets = [0, 48], sizes = [8, 16], strides = [1, 1]} : vector<8x128xf32> to vector<8x16xf32>
    %c0_28 = arith.constant 0 : index
    %c3_29 = arith.constant 3 : index
    %c0_30 = arith.constant 0 : index
    %c0_31 = arith.constant 0 : index
    %27 = vector.load %arg5[%c0_28, %c3_29, %c0_30, %c0_31] : memref<1x8x8x16xf32, #tpu.memory_space<vmem>>, vector<1x1x8x16xf32>
    %28 = vector.shape_cast %27 : vector<1x1x8x16xf32> to vector<8x16xf32>
    %29 = vector.shape_cast %26 : vector<8x16xf32> to vector<1x1x8x16xf32>
    tpu.vector_store %arg5[%c0_28, %c3_29, %c0_30, %c0_31], %29 {strides = array<i32>} : memref<1x8x8x16xf32, #tpu.memory_space<vmem>>, vector<1x1x8x16xf32>,
    %30 = vector.extract_strided_slice %13 {offsets = [0, 64], sizes = [8, 16], strides = [1, 1]} : vector<8x128xf32> to vector<8x16xf32>
    %c0_32 = arith.constant 0 : index
    %c4 = arith.constant 4 : index
    %c0_33 = arith.constant 0 : index
    %c0_34 = arith.constant 0 : index
    %31 = vector.load %arg5[%c0_32, %c4, %c0_33, %c0_34] : memref<1x8x8x16xf32, #tpu.memory_space<vmem>>, vector<1x1x8x16xf32>
    %32 = vector.shape_cast %31 : vector<1x1x8x16xf32> to vector<8x16xf32>
    %33 = vector.shape_cast %30 : vector<8x16xf32> to vector<1x1x8x16xf32>
    tpu.vector_store %arg5[%c0_32, %c4, %c0_33, %c0_34], %33 {strides = array<i32>} : memref<1x8x8x16xf32, #tpu.memory_space<vmem>>, vector<1x1x8x16xf32>,
    %34 = vector.extract_strided_slice %13 {offsets = [0, 80], sizes = [8, 16], strides = [1, 1]} : vector<8x128xf32> to vector<8x16xf32>
    %c0_35 = arith.constant 0 : index
    %c5 = arith.constant 5 : index
    %c0_36 = arith.constant 0 : index
    %c0_37 = arith.constant 0 : index
    %35 = vector.load %arg5[%c0_35, %c5, %c0_36, %c0_37] : memref<1x8x8x16xf32, #tpu.memory_space<vmem>>, vector<1x1x8x16xf32>
    %36 = vector.shape_cast %35 : vector<1x1x8x16xf32> to vector<8x16xf32>
    %37 = vector.shape_cast %34 : vector<8x16xf32> to vector<1x1x8x16xf32>
    tpu.vector_store %arg5[%c0_35, %c5, %c0_36, %c0_37], %37 {strides = array<i32>} : memref<1x8x8x16xf32, #tpu.memory_space<vmem>>, vector<1x1x8x16xf32>,
    %38 = vector.extract_strided_slice %13 {offsets = [0, 96], sizes = [8, 16], strides = [1, 1]} : vector<8x128xf32> to vector<8x16xf32>
    %c0_38 = arith.constant 0 : index
    %c6 = arith.constant 6 : index
    %c0_39 = arith.constant 0 : index
    %c0_40 = arith.constant 0 : index
    %39 = vector.load %arg5[%c0_38, %c6, %c0_39, %c0_40] : memref<1x8x8x16xf32, #tpu.memory_space<vmem>>, vector<1x1x8x16xf32>
    %40 = vector.shape_cast %39 : vector<1x1x8x16xf32> to vector<8x16xf32>
    %41 = vector.shape_cast %38 : vector<8x16xf32> to vector<1x1x8x16xf32>
    tpu.vector_store %arg5[%c0_38, %c6, %c0_39, %c0_40], %41 {strides = array<i32>} : memref<1x8x8x16xf32, #tpu.memory_space<vmem>>, vector<1x1x8x16xf32>,
    %42 = vector.extract_strided_slice %13 {offsets = [0, 112], sizes = [8, 16], strides = [1, 1]} : vector<8x128xf32> to vector<8x16xf32>
    %c0_41 = arith.constant 0 : index
    %c7 = arith.constant 7 : index
    %c0_42 = arith.constant 0 : index
    %c0_43 = arith.constant 0 : index
    %43 = vector.load %arg5[%c0_41, %c7, %c0_42, %c0_43] : memref<1x8x8x16xf32, #tpu.memory_space<vmem>>, vector<1x1x8x16xf32>
    %44 = vector.shape_cast %43 : vector<1x1x8x16xf32> to vector<8x16xf32>
    %45 = vector.shape_cast %42 : vector<8x16xf32> to vector<1x1x8x16xf32>
    tpu.vector_store %arg5[%c0_41, %c7, %c0_42, %c0_43], %45 {strides = array<i32>} : memref<1x8x8x16xf32, #tpu.memory_space<vmem>>, vector<1x1x8x16xf32>,
    return
  }
  func.func @transform_0(%arg0: i32, %arg1: i32) -> (i32, i32, i32, i32) {
    %c0_i32 = arith.constant 0 : i32
    %c0_i32_0 = arith.constant 0 : i32
    %c0_i32_1 = arith.constant 0 : i32
    return %arg0, %c0_i32, %arg1, %c0_i32_0 : i32, i32, i32, i32
  }
  func.func @transform_1(%arg0: i32, %arg1: i32) -> (i32, i32) {
    %c0_i32 = arith.constant 0 : i32
    %c0_i32_0 = arith.constant 0 : i32
    %c0_i32_1 = arith.constant 0 : i32
    return %c0_i32, %c0_i32_0 : i32, i32
  }
  func.func @transform_2(%arg0: i32, %arg1: i32) -> (i32, i32) {
    %c0_i32 = arith.constant 0 : i32
    %c0_i32_0 = arith.constant 0 : i32
    %c0_i32_1 = arith.constant 0 : i32
    return %c0_i32, %c0_i32_0 : i32, i32
  }
  func.func @transform_3(%arg0: i32, %arg1: i32) -> (i32, i32, i32, i32) {
    %c0_i32 = arith.constant 0 : i32
    %c0_i32_0 = arith.constant 0 : i32
    %c0_i32_1 = arith.constant 0 : i32
    return %arg0, %c0_i32, %arg1, %c0_i32_0 : i32, i32, i32, i32
  }
}

module attributes {stable_mosaic.version = 11 : i64} {
  func.func @_gcn_kernel(%arg0: i32, %arg1: i32, %arg2: memref<1x4x8x16xf32, #tpu.memory_space<vmem>>, %arg3: memref<64x128xf32, #tpu.memory_space<vmem>>, %arg4: memref<1x128xf32, #tpu.memory_space<vmem>>, %arg5: memref<1x8x8x16xf32, #tpu.memory_space<vmem>>, %arg6: memref<8x64xf32, #tpu.memory_space<vmem>>) attributes {dimension_semantics = [#tpu.dimension_semantics<parallel>, #tpu.dimension_semantics<parallel>], iteration_bounds = array<i64: 2, 2>, scalar_prefetch = 0 : i64, scratch_operands = 1 : i64, tpu.core_type = #tpu.core_type<tc>, window_params = [{transform_indices = @transform_0, window_bounds = array<i64: 1, 4, 8, 16>}, {pipeline_mode = #tpu.pipeline_mode<synchronous>, transform_indices = @transform_1, window_bounds = array<i64: 64, 128>}, {pipeline_mode = #tpu.pipeline_mode<synchronous>, transform_indices = @transform_2, window_bounds = array<i64: 1, 128>}, {transform_indices = @transform_3, window_bounds = array<i64: 1, 8, 8, 16>}]} {
    %c0 = arith.constant 0 : index
    %c0_0 = arith.constant 0 : index
    %c0_1 = arith.constant 0 : index
    %c0_2 = arith.constant 0 : index
    %0 = vector.load %arg2[%c0, %c0_0, %c0_1, %c0_2] : memref<1x4x8x16xf32, #tpu.memory_space<vmem>>, vector<1x1x8x16xf32>
    %1 = vector.shape_cast %0 : vector<1x1x8x16xf32> to vector<8x16xf32>
    %c0_3 = arith.constant 0 : index
    %c0_4 = arith.constant 0 : index
    %2 = vector.load %arg6[%c0_3, %c0_4] : memref<8x64xf32, #tpu.memory_space<vmem>>, vector<8x16xf32>
    tpu.vector_store %arg6[%c0_3, %c0_4], %1 {strides = array<i32>} : memref<8x64xf32, #tpu.memory_space<vmem>>, vector<8x16xf32>,
    %c0_5 = arith.constant 0 : index
    %c1 = arith.constant 1 : index
    %c0_6 = arith.constant 0 : index
    %c0_7 = arith.constant 0 : index
    %3 = vector.load %arg2[%c0_5, %c1, %c0_6, %c0_7] : memref<1x4x8x16xf32, #tpu.memory_space<vmem>>, vector<1x1x8x16xf32>
    %4 = vector.shape_cast %3 : vector<1x1x8x16xf32> to vector<8x16xf32>
    %c0_8 = arith.constant 0 : index
    %c16 = arith.constant 16 : index
    %5 = vector.load %arg6[%c0_8, %c16] : memref<8x64xf32, #tpu.memory_space<vmem>>, vector<8x16xf32>
    tpu.vector_store %arg6[%c0_8, %c16], %4 {strides = array<i32>} : memref<8x64xf32, #tpu.memory_space<vmem>>, vector<8x16xf32>,
    %c0_9 = arith.constant 0 : index
    %c2 = arith.constant 2 : index
    %c0_10 = arith.constant 0 : index
    %c0_11 = arith.constant 0 : index
    %6 = vector.load %arg2[%c0_9, %c2, %c0_10, %c0_11] : memref<1x4x8x16xf32, #tpu.memory_space<vmem>>, vector<1x1x8x16xf32>
    %7 = vector.shape_cast %6 : vector<1x1x8x16xf32> to vector<8x16xf32>
    %c0_12 = arith.constant 0 : index
    %c32 = arith.constant 32 : index
    %8 = vector.load %arg6[%c0_12, %c32] : memref<8x64xf32, #tpu.memory_space<vmem>>, vector<8x16xf32>
    tpu.vector_store %arg6[%c0_12, %c32], %7 {strides = array<i32>} : memref<8x64xf32, #tpu.memory_space<vmem>>, vector<8x16xf32>,
    %c0_13 = arith.constant 0 : index
    %c3 = arith.constant 3 : index
    %c0_14 = arith.constant 0 : index
    %c0_15 = arith.constant 0 : index
    %9 = vector.load %arg2[%c0_13, %c3, %c0_14, %c0_15] : memref<1x4x8x16xf32, #tpu.memory_space<vmem>>, vector<1x1x8x16xf32>
    %10 = vector.shape_cast %9 : vector<1x1x8x16xf32> to vector<8x16xf32>
    %c0_16 = arith.constant 0 : index
    %c48 = arith.constant 48 : index
    %11 = vector.load %arg6[%c0_16, %c48] : memref<8x64xf32, #tpu.memory_space<vmem>>, vector<8x16xf32>
    tpu.vector_store %arg6[%c0_16, %c48], %10 {strides = array<i32>} : memref<8x64xf32, #tpu.memory_space<vmem>>, vector<8x16xf32>,
    %c0_17 = arith.constant 0 : index
    %c0_18 = arith.constant 0 : index
    %12 = vector.load %arg6[%c0_17, %c0_18] : memref<8x64xf32, #tpu.memory_space<vmem>>, vector<8x64xf32>
    %c0_19 = arith.constant 0 : index
    %c0_20 = arith.constant 0 : index
    %13 = vector.load %arg3[%c0_19, %c0_20] : memref<64x128xf32, #tpu.memory_space<vmem>>, vector<64x128xf32>
    %cst = arith.constant dense<0.000000e+00> : vector<8x128xf32>
    %14 = tpu.matmul %12, %13, %cst {dimension_numbers = #tpu.dot_dimension_numbers<[1], [0], [0], [1], [0, 0, 1, 1], [], []>} : vector<8x64xf32>, vector<64x128xf32>, vector<8x128xf32> -> vector<8x128xf32>
    %c0_21 = arith.constant 0 : index
    %c0_22 = arith.constant 0 : index
    %15 = vector.load %arg4[%c0_21, %c0_22] : memref<1x128xf32, #tpu.memory_space<vmem>>, vector<1x128xf32>
    %16 = vector.broadcast %15 : vector<1x128xf32> to vector<8x128xf32>
    %17 = arith.addf %14, %16 : vector<8x128xf32>
    %18 = vector.extract_strided_slice %17 {offsets = [0, 0], sizes = [8, 16], strides = [1, 1]} : vector<8x128xf32> to vector<8x16xf32>
    %c0_23 = arith.constant 0 : index
    %c0_24 = arith.constant 0 : index
    %c0_25 = arith.constant 0 : index
    %c0_26 = arith.constant 0 : index
    %19 = vector.load %arg5[%c0_23, %c0_24, %c0_25, %c0_26] : memref<1x8x8x16xf32, #tpu.memory_space<vmem>>, vector<1x1x8x16xf32>
    %20 = vector.shape_cast %19 : vector<1x1x8x16xf32> to vector<8x16xf32>
    %21 = vector.shape_cast %18 : vector<8x16xf32> to vector<1x1x8x16xf32>
    tpu.vector_store %arg5[%c0_23, %c0_24, %c0_25, %c0_26], %21 {strides = array<i32>} : memref<1x8x8x16xf32, #tpu.memory_space<vmem>>, vector<1x1x8x16xf32>,
    %22 = vector.extract_strided_slice %17 {offsets = [0, 16], sizes = [8, 16], strides = [1, 1]} : vector<8x128xf32> to vector<8x16xf32>
    %c0_27 = arith.constant 0 : index
    %c1_28 = arith.constant 1 : index
    %c0_29 = arith.constant 0 : index
    %c0_30 = arith.constant 0 : index
    %23 = vector.load %arg5[%c0_27, %c1_28, %c0_29, %c0_30] : memref<1x8x8x16xf32, #tpu.memory_space<vmem>>, vector<1x1x8x16xf32>
    %24 = vector.shape_cast %23 : vector<1x1x8x16xf32> to vector<8x16xf32>
    %25 = vector.shape_cast %22 : vector<8x16xf32> to vector<1x1x8x16xf32>
    tpu.vector_store %arg5[%c0_27, %c1_28, %c0_29, %c0_30], %25 {strides = array<i32>} : memref<1x8x8x16xf32, #tpu.memory_space<vmem>>, vector<1x1x8x16xf32>,
    %26 = vector.extract_strided_slice %17 {offsets = [0, 32], sizes = [8, 16], strides = [1, 1]} : vector<8x128xf32> to vector<8x16xf32>
    %c0_31 = arith.constant 0 : index
    %c2_32 = arith.constant 2 : index
    %c0_33 = arith.constant 0 : index
    %c0_34 = arith.constant 0 : index
    %27 = vector.load %arg5[%c0_31, %c2_32, %c0_33, %c0_34] : memref<1x8x8x16xf32, #tpu.memory_space<vmem>>, vector<1x1x8x16xf32>
    %28 = vector.shape_cast %27 : vector<1x1x8x16xf32> to vector<8x16xf32>
    %29 = vector.shape_cast %26 : vector<8x16xf32> to vector<1x1x8x16xf32>
    tpu.vector_store %arg5[%c0_31, %c2_32, %c0_33, %c0_34], %29 {strides = array<i32>} : memref<1x8x8x16xf32, #tpu.memory_space<vmem>>, vector<1x1x8x16xf32>,
    %30 = vector.extract_strided_slice %17 {offsets = [0, 48], sizes = [8, 16], strides = [1, 1]} : vector<8x128xf32> to vector<8x16xf32>
    %c0_35 = arith.constant 0 : index
    %c3_36 = arith.constant 3 : index
    %c0_37 = arith.constant 0 : index
    %c0_38 = arith.constant 0 : index
    %31 = vector.load %arg5[%c0_35, %c3_36, %c0_37, %c0_38] : memref<1x8x8x16xf32, #tpu.memory_space<vmem>>, vector<1x1x8x16xf32>
    %32 = vector.shape_cast %31 : vector<1x1x8x16xf32> to vector<8x16xf32>
    %33 = vector.shape_cast %30 : vector<8x16xf32> to vector<1x1x8x16xf32>
    tpu.vector_store %arg5[%c0_35, %c3_36, %c0_37, %c0_38], %33 {strides = array<i32>} : memref<1x8x8x16xf32, #tpu.memory_space<vmem>>, vector<1x1x8x16xf32>,
    %34 = vector.extract_strided_slice %17 {offsets = [0, 64], sizes = [8, 16], strides = [1, 1]} : vector<8x128xf32> to vector<8x16xf32>
    %c0_39 = arith.constant 0 : index
    %c4 = arith.constant 4 : index
    %c0_40 = arith.constant 0 : index
    %c0_41 = arith.constant 0 : index
    %35 = vector.load %arg5[%c0_39, %c4, %c0_40, %c0_41] : memref<1x8x8x16xf32, #tpu.memory_space<vmem>>, vector<1x1x8x16xf32>
    %36 = vector.shape_cast %35 : vector<1x1x8x16xf32> to vector<8x16xf32>
    %37 = vector.shape_cast %34 : vector<8x16xf32> to vector<1x1x8x16xf32>
    tpu.vector_store %arg5[%c0_39, %c4, %c0_40, %c0_41], %37 {strides = array<i32>} : memref<1x8x8x16xf32, #tpu.memory_space<vmem>>, vector<1x1x8x16xf32>,
    %38 = vector.extract_strided_slice %17 {offsets = [0, 80], sizes = [8, 16], strides = [1, 1]} : vector<8x128xf32> to vector<8x16xf32>
    %c0_42 = arith.constant 0 : index
    %c5 = arith.constant 5 : index
    %c0_43 = arith.constant 0 : index
    %c0_44 = arith.constant 0 : index
    %39 = vector.load %arg5[%c0_42, %c5, %c0_43, %c0_44] : memref<1x8x8x16xf32, #tpu.memory_space<vmem>>, vector<1x1x8x16xf32>
    %40 = vector.shape_cast %39 : vector<1x1x8x16xf32> to vector<8x16xf32>
    %41 = vector.shape_cast %38 : vector<8x16xf32> to vector<1x1x8x16xf32>
    tpu.vector_store %arg5[%c0_42, %c5, %c0_43, %c0_44], %41 {strides = array<i32>} : memref<1x8x8x16xf32, #tpu.memory_space<vmem>>, vector<1x1x8x16xf32>,
    %42 = vector.extract_strided_slice %17 {offsets = [0, 96], sizes = [8, 16], strides = [1, 1]} : vector<8x128xf32> to vector<8x16xf32>
    %c0_45 = arith.constant 0 : index
    %c6 = arith.constant 6 : index
    %c0_46 = arith.constant 0 : index
    %c0_47 = arith.constant 0 : index
    %43 = vector.load %arg5[%c0_45, %c6, %c0_46, %c0_47] : memref<1x8x8x16xf32, #tpu.memory_space<vmem>>, vector<1x1x8x16xf32>
    %44 = vector.shape_cast %43 : vector<1x1x8x16xf32> to vector<8x16xf32>
    %45 = vector.shape_cast %42 : vector<8x16xf32> to vector<1x1x8x16xf32>
    tpu.vector_store %arg5[%c0_45, %c6, %c0_46, %c0_47], %45 {strides = array<i32>} : memref<1x8x8x16xf32, #tpu.memory_space<vmem>>, vector<1x1x8x16xf32>,
    %46 = vector.extract_strided_slice %17 {offsets = [0, 112], sizes = [8, 16], strides = [1, 1]} : vector<8x128xf32> to vector<8x16xf32>
    %c0_48 = arith.constant 0 : index
    %c7 = arith.constant 7 : index
    %c0_49 = arith.constant 0 : index
    %c0_50 = arith.constant 0 : index
    %47 = vector.load %arg5[%c0_48, %c7, %c0_49, %c0_50] : memref<1x8x8x16xf32, #tpu.memory_space<vmem>>, vector<1x1x8x16xf32>
    %48 = vector.shape_cast %47 : vector<1x1x8x16xf32> to vector<8x16xf32>
    %49 = vector.shape_cast %46 : vector<8x16xf32> to vector<1x1x8x16xf32>
    tpu.vector_store %arg5[%c0_48, %c7, %c0_49, %c0_50], %49 {strides = array<i32>} : memref<1x8x8x16xf32, #tpu.memory_space<vmem>>, vector<1x1x8x16xf32>,
    return
  }
  func.func @transform_0(%arg0: i32, %arg1: i32) -> (i32, i32, i32, i32) {
    %c0_i32 = arith.constant 0 : i32
    %c0_i32_0 = arith.constant 0 : i32
    %c0_i32_1 = arith.constant 0 : i32
    return %arg0, %c0_i32, %arg1, %c0_i32_0 : i32, i32, i32, i32
  }
  func.func @transform_1(%arg0: i32, %arg1: i32) -> (i32, i32) {
    %c0_i32 = arith.constant 0 : i32
    %c0_i32_0 = arith.constant 0 : i32
    %c0_i32_1 = arith.constant 0 : i32
    return %c0_i32, %c0_i32_0 : i32, i32
  }
  func.func @transform_2(%arg0: i32, %arg1: i32) -> (i32, i32) {
    %c0_i32 = arith.constant 0 : i32
    %c0_i32_0 = arith.constant 0 : i32
    %c0_i32_1 = arith.constant 0 : i32
    return %c0_i32, %c0_i32_0 : i32, i32
  }
  func.func @transform_3(%arg0: i32, %arg1: i32) -> (i32, i32, i32, i32) {
    %c0_i32 = arith.constant 0 : i32
    %c0_i32_0 = arith.constant 0 : i32
    %c0_i32_1 = arith.constant 0 : i32
    return %arg0, %c0_i32, %arg1, %c0_i32_0 : i32, i32, i32, i32
  }
}

</mosaic_0001>

<llo_original>
// kernel: gcn_forward.1
$region0: #{gcn_forward.1}
  #allocation0 [shape = 'u32[]', space=smem, size = 0x4, offset = 0x4, fixed_abs, tag = 'smem constant byte address 0x4 - core index']
  #allocation1 [shape = 'u32[144,128]{1,0:T(1,128)}', space=vmem, size = 0x12000, scoped, tag = 'internal scratch']
  #allocation2 [shape = 'f32[8,64]{1,0:T(8,128)}', space=vmem, size = 0x1000, scoped, tag = 'scratch operand']
  %s0 = inlined_call_operand.vmem [shape: f32[2,4,16,16], index: 0, kind: input, shape index: {}]
  %s1 = inlined_call_operand.vmem [shape: f32[64,128], index: 1, kind: input, shape index: {}]
  %s2 = inlined_call_operand.vmem [shape: f32[1,128], index: 2, kind: input, shape index: {}]
  %s3 = inlined_call_operand.hbm [shape: f32[2,8,16,16], index: 3, kind: output, shape index: {}]
  %s4 = sld [smem:[#allocation0]]
  $region83: #{gcn_forward.1} parent=0
    _
  %s6 = ssub.s32 1, %s4
  %s7 = scalar_select 0, %s6, %s4
  $region1: #{gcn_forward.1} parent=0
    #allocation3 [shape = 'u8[32768]{0}', space=vmem, size = 0x8000, scoped, tag = 'input window, operand 0']
    #allocation4 [shape = 'u8[65536]{0}', space=vmem, size = 0x10000, scoped, tag = 'output window, operand 0']
    #allocation5 [shape = 's32[2]{0}', space=sflag, size = 0x8, scoped, tag = 'scoped memory for gcn_forward.1']
    %8 = vsyncpa [#allocation5], 0
    %s9 = scalar_lea.sflag [#allocation5], 1
    %10 = vsyncpa %s9, 0
    loop: start=0, step=1, limit=6
    $region2: #{gcn_forward.1} parent=1 // loop_pre_header
      _
    $region3: #{gcn_forward.1} parent=1 // loop_header
      %s12 = sphi 0, %s16
      %p13 = scmp.ge.s32.totalorder %s12, 6
      %s19 = sphi 0, %s31
      %s20 = sphi 0, %s27
      %s21 = sphi 0, %s19
      %s22 = sphi 0, %s20
      %s23 = sphi 0, %s21
      %s24 = sphi 0, %s22
      %s36 = sphi 0, %s38
      %s39 = sphi 0, %s36
      %s40 = sphi 0, %s39
      %s56 = sphi 0, %s40
      %s60 = sphi 0, %s60
      %s62 = sphi 0, %s60
      %s63 = sphi 0, %s62
      %s77 = sphi 0, %s63
      %s81 = sphi 0, %s81
      %s83 = sphi 0, %s81
      %s84 = sphi 0, %s83
      %s98 = sphi 0, %s84
      %s106 = sphi 0, %s108
      %s109 = sphi 0, %s106
      %s110 = sphi 0, %s109
      %s126 = sphi 0, %s110
    $region4: #{gcn_forward.1} parent=1 // loop_header_branch
      %15 = sbr.rel (%p13) target = $region8
    $region5: #{gcn_forward.1} parent=1 // loop_body
      %s17 = ssub.s32 %s12, 1
      %s18 = ssub.s32 %s12, 2
      %s25 = sadd.s32 1, %s20
      %p26 = scmp.ge.s32.totalorder %s25, 2
      %s27 = scalar_select %p26, 0, %s25
      %s28 = sadd.s32 1, %s19
      %s29 = scalar_select %p26, %s28, %s19
      %p30 = scmp.ge.s32.totalorder %s29, 2
      %s31 = scalar_select %p30, 0, %s29
      %s32 = ssub.s32 %s19, %s31
      %s33 = ssub.s32 %s20, %s27
      %s34 = sor.u32 %s32, %s33
      %p35 = scmp.eq.s32.totalorder %s34, 0
      %s37 = sadd.s32 %s36, 1
      %s38 = scalar_select %p35, %s36, %s37
      %p41 = pneg %p35
      %p42 = scmp.eq.s32.totalorder %s12, 3
      %p43 = por %p41, %p42
      %p44 = scmp.ne.s32.totalorder %s36, %s39
      %p45 = scmp.eq.s32.totalorder %s12, 0
      %p46 = por %p44, %p45
      %p47 = scmp.ne.s32.totalorder %s36, %s39
      %p48 = scmp.eq.s32.totalorder %s17, 3
      %p49 = por %p47, %p48
      %p50 = scmp.ne.s32.totalorder %s39, %s40
      %p51 = scmp.eq.s32.totalorder %s17, 0
      %p52 = por %p50, %p51
      %p53 = scmp.ne.s32.totalorder %s39, %s40
      %p54 = scmp.eq.s32.totalorder %s18, 3
      %p55 = por %p53, %p54
      %p57 = scmp.ne.s32.totalorder %s40, %s56
      %p58 = scmp.eq.s32.totalorder %s18, 0
      %p59 = por %p57, %p58
      %s61 = sadd.s32 %s60, 1
      %p64 = scmp.eq.s32.totalorder %s12, 3
      %p65 = scmp.ne.s32.totalorder %s60, %s62
      %p66 = scmp.eq.s32.totalorder %s12, 0
      %p67 = por %p65, %p66
      %p68 = scmp.ne.s32.totalorder %s60, %s62
      %p69 = scmp.eq.s32.totalorder %s17, 3
      %p70 = por %p68, %p69
      %p71 = scmp.ne.s32.totalorder %s62, %s63
      %p72 = scmp.eq.s32.totalorder %s17, 0
      %p73 = por %p71, %p72
      %p74 = scmp.ne.s32.totalorder %s62, %s63
      %p75 = scmp.eq.s32.totalorder %s18, 3
      %p76 = por %p74, %p75
      %p78 = scmp.ne.s32.totalorder %s63, %s77
      %p79 = scmp.eq.s32.totalorder %s18, 0
      %p80 = por %p78, %p79
      %s82 = sadd.s32 %s81, 1
      %p85 = scmp.eq.s32.totalorder %s12, 3
      %p86 = scmp.ne.s32.totalorder %s81, %s83
      %p87 = scmp.eq.s32.totalorder %s12, 0
      %p88 = por %p86, %p87
      %p89 = scmp.ne.s32.totalorder %s81, %s83
      %p90 = scmp.eq.s32.totalorder %s17, 3
      %p91 = por %p89, %p90
      %p92 = scmp.ne.s32.totalorder %s83, %s84
      %p93 = scmp.eq.s32.totalorder %s17, 0
      %p94 = por %p92, %p93
      %p95 = scmp.ne.s32.totalorder %s83, %s84
      %p96 = scmp.eq.s32.totalorder %s18, 3
      %p97 = por %p95, %p96
      %p99 = scmp.ne.s32.totalorder %s84, %s98
      %p100 = scmp.eq.s32.totalorder %s18, 0
      %p101 = por %p99, %p100
      %s102 = ssub.s32 %s19, %s31
      %s103 = ssub.s32 %s20, %s27
      %s104 = sor.u32 %s102, %s103
      %p105 = scmp.eq.s32.totalorder %s104, 0
      %s107 = sadd.s32 %s106, 1
      %s108 = scalar_select %p105, %s106, %s107
      %p111 = pneg %p105
      %p112 = scmp.eq.s32.totalorder %s12, 3
      %p113 = por %p111, %p112
      %p114 = scmp.ne.s32.totalorder %s106, %s109
      %p115 = scmp.eq.s32.totalorder %s12, 0
      %p116 = por %p114, %p115
      %p117 = scmp.ne.s32.totalorder %s106, %s109
      %p118 = scmp.eq.s32.totalorder %s17, 3
      %p119 = por %p117, %p118
      %p120 = scmp.ne.s32.totalorder %s109, %s110
      %p121 = scmp.eq.s32.totalorder %s17, 0
      %p122 = por %p120, %p121
      %p123 = scmp.ne.s32.totalorder %s109, %s110
      %p124 = scmp.eq.s32.totalorder %s18, 3
      %p125 = por %p123, %p124
      %p127 = scmp.ne.s32.totalorder %s110, %s126
      %p128 = scmp.eq.s32.totalorder %s18, 0
      %p129 = por %p127, %p128
      %p130 = scmp.le.s32.totalorder 1, %s12
      %p131 = scmp.lt.s32.totalorder %s12, 5
      %p132 = pnand %p130, %p131
      %p133 = pneg %p132
      // Predicated region
      $region9: #{gcn_forward.1} parent=5 // pred_check
        _
      $region10: #{gcn_forward.1} parent=5 // pred_check_branch
        %135 = sbr.rel (%p132) target = $region12
      $region11: #{gcn_forward.1} parent=5 // pred_region
        %s136 = ssub.s32 %s12, 1
        // Predicated region
        $region13: #{gcn_forward.1} parent=11 // pred_check
          %p137 = pneg %p73
        $region14: #{gcn_forward.1} parent=11 // pred_check_branch
          %139 = sbr.rel (%p137) target = $region16
        $region15: #{gcn_forward.1} parent=11 // pred_region
          _
        $region16: #{gcn_forward.1} parent=11 // pred_fallthru
          _
        // Predicated region
        $region17: #{gcn_forward.1} parent=11 // pred_check
          %p140 = pneg %p94
        $region18: #{gcn_forward.1} parent=11 // pred_check_branch
          %142 = sbr.rel (%p140) target = $region20
        $region19: #{gcn_forward.1} parent=11 // pred_region
          _
        $region20: #{gcn_forward.1} parent=11 // pred_fallthru
          _
      $region12: #{gcn_forward.1} parent=5 // pred_fallthru
        _
      %p143 = scmp.lt.s32.totalorder %s12, 4
      // Predicated region
      $region21: #{gcn_forward.1} parent=5 // pred_check
        %p144 = pneg %p143
      $region22: #{gcn_forward.1} parent=5 // pred_check_branch
        %146 = sbr.rel (%p144) target = $region24
      $region23: #{gcn_forward.1} parent=5 // pred_region
        // Predicated region
        $region25: #{gcn_forward.1} parent=23 // pred_check
          %p147 = pneg %p46
        $region26: #{gcn_forward.1} parent=23 // pred_check_branch
          %149 = sbr.rel (%p147) target = $region28
        $region27: #{gcn_forward.1} parent=23 // pred_region
          %s150 = sand.u32 %s36, 1
          %s151 = sand.u32 %s36, 1
          %s152 = smul.addr %s151, 32
          %s153 = scalar_lea.vmem [#allocation3], %s152
          %s154 = smul.addr %s19, 8
          %s155 = sadd.s32 %s20, %s154
          %s156 = smul.addr %s155, 8
          %s157 = scalar_lea.vmem %s0, %s156
          // Predicated region
          $region29: #{gcn_forward.1} parent=27 // pred_check
            _
          $region30: #{gcn_forward.1} parent=27 // pred_check_branch
            %159 = sbr.rel (0) target = $region32
          $region31: #{gcn_forward.1} parent=27 // pred_region
            // Predicated region
            $region33: #{gcn_forward.1} parent=31 // pred_check
              _
            $region34: #{gcn_forward.1} parent=31 // pred_check_branch
              %161 = sbr.rel (0) target = $region36
            $region35: #{gcn_forward.1} parent=31 // pred_region
              // Predicated region
              $region48: #{gcn_forward.1} parent=35 // pred_check
                _
              $region49: #{gcn_forward.1} parent=35 // pred_check_branch
                %182 = sbr.rel (0) target = $region51
              $region50: #{gcn_forward.1} parent=35 // pred_region
                loop: start=0, step=1, limit=1
                $region52: #{gcn_forward.1} parent=50 // loop_pre_header
                  _
                $region53: #{gcn_forward.1} parent=50 // loop_header
                  %s184 = sphi 0, %s188
                  %p185 = scmp.ge.s32.totalorder %s184, 1
                  %s189 = sphi %s157, %s157
                  %s190 = sphi %s153, %s153
                $region54: #{gcn_forward.1} parent=50 // loop_header_branch
                  %187 = sbr.rel (%p185) target = $region58
                $region55: #{gcn_forward.1} parent=50 // loop_body
                  %v191 = vld [vmem:[%s189] sm:$0xff]
                  %192 = vst [vmem:[%s190] sm:$0xff] %v191
                  %v193 = vld [vmem:[%s189 + $0x10] sm:$0xff]
                  %194 = vst [vmem:[%s190 + $0x8] sm:$0xff] %v193
                  %v195 = vld [vmem:[%s189 + $0x20] sm:$0xff]
                  %196 = vst [vmem:[%s190 + $0x10] sm:$0xff] %v195
                  %v197 = vld [vmem:[%s189 + $0x30] sm:$0xff]
                  %198 = vst [vmem:[%s190 + $0x18] sm:$0xff] %v197
                $region56: #{gcn_forward.1} parent=50 // loop_footer
                  %s188 = sadd.s32 1, %s184
                $region57: #{gcn_forward.1} parent=50 // loop_footer_branch
                  %183 = sbr.rel target = $region53
                $region58: #{gcn_forward.1} parent=50 // loop_exit
                  _
              $region51: #{gcn_forward.1} parent=35 // pred_fallthru
                _
              // Predicated region
              $region59: #{gcn_forward.1} parent=35 // pred_check
                _
              $region60: #{gcn_forward.1} parent=35 // pred_check_branch
                %200 = sbr.rel target = $region62
              $region61: #{gcn_forward.1} parent=35 // pred_region
                _
              $region62: #{gcn_forward.1} parent=35 // pred_fallthru
                _
            $region36: #{gcn_forward.1} parent=31 // pred_fallthru
              _
            // Predicated region
            $region37: #{gcn_forward.1} parent=31 // pred_check
              _
            $region38: #{gcn_forward.1} parent=31 // pred_check_branch
              %163 = sbr.rel target = $region40
            $region39: #{gcn_forward.1} parent=31 // pred_region
              loop: start=0, step=1, limit=1
              $region41: #{gcn_forward.1} parent=39 // loop_pre_header
                _
              $region42: #{gcn_forward.1} parent=39 // loop_header
                %s166 = sphi 0, %s170
                %p167 = scmp.ge.s32.totalorder %s166, 1
                %s171 = sphi %s157, %s157
                %s172 = sphi %s153, %s153
              $region43: #{gcn_forward.1} parent=39 // loop_header_branch
                %169 = sbr.rel (%p167) target = $region47
              $region44: #{gcn_forward.1} parent=39 // loop_body
                %v173 = vld [vmem:[%s171] sm:$0xff]
                %174 = vst [vmem:[%s172] sm:$0xff] %v173
                %v175 = vld [vmem:[%s171 + $0x10] sm:$0xff]
                %176 = vst [vmem:[%s172 + $0x8] sm:$0xff] %v175
                %v177 = vld [vmem:[%s171 + $0x20] sm:$0xff]
                %178 = vst [vmem:[%s172 + $0x10] sm:$0xff] %v177
                %v179 = vld [vmem:[%s171 + $0x30] sm:$0xff]
                %180 = vst [vmem:[%s172 + $0x18] sm:$0xff] %v179
              $region45: #{gcn_forward.1} parent=39 // loop_footer
                %s170 = sadd.s32 1, %s166
              $region46: #{gcn_forward.1} parent=39 // loop_footer_branch
                %165 = sbr.rel target = $region42
              $region47: #{gcn_forward.1} parent=39 // loop_exit
                _
            $region40: #{gcn_forward.1} parent=31 // pred_fallthru
              _
          $region32: #{gcn_forward.1} parent=27 // pred_fallthru
            _
          %201 = vnop
        $region28: #{gcn_forward.1} parent=23 // pred_fallthru
          _
      $region24: #{gcn_forward.1} parent=5 // pred_fallthru
        _
      %p202 = scmp.le.s32.totalorder 1, %s12
      %p203 = scmp.lt.s32.totalorder %s12, 5
      %p204 = pnand %p202, %p203
      %p205 = pneg %p204
      // Predicated region
      $region63: #{gcn_forward.1} parent=5 // pred_check
        _
      $region64: #{gcn_forward.1} parent=5 // pred_check_branch
        %207 = sbr.rel (%p204) target = $region66
      $region65: #{gcn_forward.1} parent=5 // pred_region
        %s208 = ssub.s32 %s12, 1
        %s209 = sand.u32 %s39, 1
        %s210 = sand.u32 %s39, 1
        %s211 = smul.addr %s210, 32
        %s212 = scalar_lea.vmem [#allocation3], %s211
        // Predicated region
        $region67: #{gcn_forward.1} parent=65 // pred_check
          %p213 = pneg %p52
        $region68: #{gcn_forward.1} parent=65 // pred_check_branch
          %215 = sbr.rel (%p213) target = $region70
        $region69: #{gcn_forward.1} parent=65 // pred_region
          _
        $region70: #{gcn_forward.1} parent=65 // pred_fallthru
          _
        %s216 = sand.u32 %s39, 1
        %s217 = sand.u32 %s39, 1
        %s218 = smul.addr %s217, 32
        %s219 = scalar_lea.vmem [#allocation3], %s218
        %p220 = pneg %p52
        %p221 = pneg %p49
        %p222 = pneg %p73
        %p223 = pneg %p70
        %p224 = pneg %p94
        %p225 = pneg %p91
        %p226 = pneg %p122
        %p227 = pneg %p119
        %s228 = sand.u32 %s109, 1
        %s229 = scalar_lea.sflag [#allocation5], %s228
        %s230 = sand.u32 %s109, 1
        %s231 = smul.addr %s230, 64
        %s232 = scalar_lea.vmem [#allocation4], %s231
        %v233 = vld [vmem:[%s212] sm:$0xff]
        %s234 = scalar_lea.vmem %s212, 8 [#allocation3]
        %v235 = vld [vmem:[%s234] sm:$0xff]
        %s236 = scalar_lea.vmem %s212, 16 [#allocation3]
        %v237 = vld [vmem:[%s236] sm:$0xff]
        %s238 = scalar_lea.vmem %s212, 24 [#allocation3]
        %v239 = vld [vmem:[%s238] sm:$0xff]
        %241 = vrot.lane.b32.xlu0 %v235, 16
        %v242 = vpop.permute.xlu0 %241
        %245 = vrot.lane.b32.xlu0 %v237, 32
        %v246 = vpop.permute.xlu0 %245
        %249 = vrot.lane.b32.xlu0 %v239, 48
        %v250 = vpop.permute.xlu0 %249
        %vm252 = vcmask 130048
        %v253 = vsel %vm252, %v233, %v242
        %vm254 = vcmask 261120
        %v255 = vsel %vm254, %v253, %v246
        %vm256 = vcmask 392192
        %v257 = vsel %vm256, %v255, %v250
        %v258 = vld [vmem:[%s1] sm:$0xff]
        %v259 = vld [vmem:[%s1 + $0x8] sm:$0xff]
        %v260 = vld [vmem:[%s1 + $0x10] sm:$0xff]
        %v261 = vld [vmem:[%s1 + $0x18] sm:$0xff]
        %v262 = vld [vmem:[%s1 + $0x20] sm:$0xff]
        %v263 = vld [vmem:[%s1 + $0x28] sm:$0xff]
        %v264 = vld [vmem:[%s1 + $0x30] sm:$0xff]
        %v265 = vld [vmem:[%s1 + $0x38] sm:$0xff]
        %v266 = vld [vmem:[%s2] sm:$0x1]
        %v268 = vlaneseq
        %v269 = vshrl.u32 %v268, 7
        %v270 = vsub.s32 0, %v269
        %v271 = vrot.slane %v266, %v270
        %vm273 = vcmask 523264
        %v275 = vsel %vm273, %v257, 0
        %277 = vmatprep.subr.mxu0 0.0
        %278 = vmatpush1.msra.mxu0 %v258
        %279 = vmatprep.subr.mxu0 0.0
        %280 = vmatpush1.msra.mxu0 %v259
        %281 = vmatprep.subr.mxu0 0.0
        %282 = vmatpush1.msra.mxu0 %v260
        %283 = vmatprep.subr.mxu0 0.0
        %284 = vmatpush1.msra.mxu0 %v261
        %285 = vmatprep.subr.mxu0 0.0
        %286 = vmatpush1.msra.mxu0 %v262
        %287 = vmatprep.subr.mxu0 0.0
        %288 = vmatpush1.msra.mxu0 %v263
        %289 = vmatprep.subr.mxu0 0.0
        %290 = vmatpush1.msra.mxu0 %v264
        %291 = vmatprep.subr.mxu0 0.0
        %292 = vmatpush1.msra.mxu0 %v265
        %293 = vmatprep.subr.mxu0 0.0
        %294 = vmatpush1.msra.mxu0 0.0
        %295 = vmatprep.subr.mxu0 0.0
        %296 = vmatpush1.msra.mxu0 0.0
        %297 = vmatprep.subr.mxu0 0.0
        %298 = vmatpush1.msra.mxu0 0.0
        %299 = vmatprep.subr.mxu0 0.0
        %300 = vmatpush1.msra.mxu0 0.0
        %301 = vmatprep.subr.mxu0 0.0
        %302 = vmatpush1.msra.mxu0 0.0
        %303 = vmatprep.subr.mxu0 0.0
        %304 = vmatpush1.msra.mxu0 0.0
        %305 = vmatprep.subr.mxu0 0.0
        %306 = vmatpush1.msra.mxu0 0.0
        %307 = vmatprep.subr.mxu0 0.0
        %308 = vmatpush1.msra.mxu0 0.0
        %309 = vmatprep.subr.mxu0 0.0
        %310 = vmatpush1.msra.mxu0 0.0
        %311 = vmatprep.subr.mxu0 0.0
        %312 = vmatpush1.msra.mxu0 0.0
        %313 = vmatprep.subr.mxu0 0.0
        %314 = vmatpush1.msra.mxu0 0.0
        %315 = vmatprep.subr.mxu0 0.0
        %316 = vmatpush1.msra.mxu0 0.0
        %317 = vmatprep.subr.mxu0 0.0
        %318 = vmatpush1.msra.mxu0 0.0
        %319 = vmatprep.subr.mxu0 0.0
        %320 = vmatpush1.msra.mxu0 0.0
        %321 = vmatprep.subr.mxu0 0.0
        %322 = vmatpush1.msra.mxu0 0.0
        %323 = vmatprep.subr.mxu0 0.0
        %324 = vmatpush1.msra.mxu0 0.0
        %325 = vmatprep.subr.mxu0 0.0
        %326 = vmatpush1.msra.mxu0 0.0
        %327 = vmatprep.subr.mxu0 0.0
        %328 = vmatpush1.msra.mxu0 0.0
        %329 = vmatprep.subr.mxu0 0.0
        %330 = vmatpush1.msra.mxu0 0.0
        %331 = vmatprep.subr.mxu0 0.0
        %332 = vmatpush1.msra.mxu0 0.0
        %333 = vmatprep.subr.mxu0 0.0
        %334 = vmatpush1.msra.mxu0 0.0
        %335 = vmatprep.subr.mxu0 0.0
        %336 = vmatpush1.msra.mxu0 0.0
        %337 = vmatprep.subr.mxu0 0.0
        %338 = vmatpush1.msra.mxu0 0.0
        %339 = vmatprep.subr.mxu0 0.0
        %340 = vmatpush1.msra.mxu0 0.0
        %341 = vmatprep.mubr.f32.mxu0 0.0
        %342 = vmatmul.mubr.f32.gmra.mrb[0].mxu0 %v275
        %v343 = vpop.f32.mrb[0].mxu0
        %v344 = vadd.f32 %v271, %v343
        %v345 = vpop.f32.mrb[0].mxu0
        %346 = vdwg.mxu0
        %347 = vst.msk [vmem:[%s232] sm:$0xff] %vm252, %v344
        %349 = vrot.lane.b32.xlu0 %v344, 112
        %v350 = vpop.permute.xlu0 %349
        %s352 = scalar_lea.vmem %s232, 8 [#allocation4]
        %353 = vst.msk [vmem:[%s352] sm:$0xff] %vm252, %v350
        %354 = vrot.lane.b32.xlu0 %v344, 96
        %v355 = vpop.permute.xlu0 %354
        %s357 = scalar_lea.vmem %s232, 16 [#allocation4]
        %358 = vst.msk [vmem:[%s357] sm:$0xff] %vm252, %v355
        %359 = vrot.lane.b32.xlu0 %v344, 80
        %v360 = vpop.permute.xlu0 %359
        %s362 = scalar_lea.vmem %s232, 24 [#allocation4]
        %363 = vst.msk [vmem:[%s362] sm:$0xff] %vm252, %v360
        %364 = vrot.lane.b32.xlu0 %v344, 64
        %v365 = vpop.permute.xlu0 %364
        %s367 = scalar_lea.vmem %s232, 32 [#allocation4]
        %368 = vst.msk [vmem:[%s367] sm:$0xff] %vm252, %v365
        %369 = vrot.lane.b32.xlu0 %v344, 48
        %v370 = vpop.permute.xlu0 %369
        %s372 = scalar_lea.vmem %s232, 40 [#allocation4]
        %373 = vst.msk [vmem:[%s372] sm:$0xff] %vm252, %v370
        %374 = vrot.lane.b32.xlu0 %v344, 32
        %v375 = vpop.permute.xlu0 %374
        %s377 = scalar_lea.vmem %s232, 48 [#allocation4]
        %378 = vst.msk [vmem:[%s377] sm:$0xff] %vm252, %v375
        %379 = vrot.lane.b32.xlu0 %v344, 16
        %v380 = vpop.permute.xlu0 %379
        %s382 = scalar_lea.vmem %s232, 56 [#allocation4]
        %383 = vst.msk [vmem:[%s382] sm:$0xff] %vm252, %v380
        %s384 = sand.u32 %s109, 1
        %s385 = scalar_lea.sflag [#allocation5], %s384
        %s386 = sand.u32 %s109, 1
        %s387 = smul.addr %s386, 64
        %s388 = scalar_lea.vmem [#allocation4], %s387
        // Predicated region
        $region71: #{gcn_forward.1} parent=65 // pred_check
          %p389 = pneg %p119
        $region72: #{gcn_forward.1} parent=65 // pred_check_branch
          %391 = sbr.rel (%p389) target = $region74
        $region73: #{gcn_forward.1} parent=65 // pred_region
          %s393 = ssub.s32 1024, 1024
          %394 = vsyncadd %s385, %s393
          %s395 = smul.addr %s21, 16
          %s396 = sadd.s32 %s22, %s395
          %s397 = smul.addr %s396, 128
          %s398 = scalar_lea.hbm %s3, %s397
          %s399 = sshll.u32 %s388, 4
          %s400 = int_to_ptr.vmem [resolvable:$true] %s399
          %405 = dma.vmem_to_hbm [thread:$0]  %s400, 1024, %s398, %s385, 128, 256, 8
        $region74: #{gcn_forward.1} parent=65 // pred_fallthru
          _
      $region66: #{gcn_forward.1} parent=5 // pred_fallthru
        _
      %p406 = scmp.le.s32.totalorder 2, %s12
      // Predicated region
      $region75: #{gcn_forward.1} parent=5 // pred_check
        %p407 = pneg %p406
      $region76: #{gcn_forward.1} parent=5 // pred_check_branch
        %409 = sbr.rel (%p407) target = $region78
      $region77: #{gcn_forward.1} parent=5 // pred_region
        %s410 = ssub.s32 %s12, 2
        // Predicated region
        $region79: #{gcn_forward.1} parent=77 // pred_check
          %p411 = pneg %p125
        $region80: #{gcn_forward.1} parent=77 // pred_check_branch
          %413 = sbr.rel (%p411) target = $region82
        $region81: #{gcn_forward.1} parent=77 // pred_region
          %s414 = sand.u32 %s110, 1
          %s415 = scalar_lea.sflag [#allocation5], %s414
          %s416 = sand.u32 %s110, 1
          %s417 = smul.addr %s416, 64
          %s418 = scalar_lea.vmem [#allocation4], %s417
          %419 = dma.done %s415, 1024
        $region82: #{gcn_forward.1} parent=77 // pred_fallthru
          _
      $region78: #{gcn_forward.1} parent=5 // pred_fallthru
        _
    $region6: #{gcn_forward.1} parent=1 // loop_footer
      %s16 = sadd.s32 1, %s12
    $region7: #{gcn_forward.1} parent=1 // loop_footer_branch
      %11 = sbr.rel target = $region3
    $region8: #{gcn_forward.1} parent=1 // loop_exit
      _
    %420 = vsyncpa [#allocation5], 1
    %s421 = scalar_lea.sflag [#allocation5], 1
    %422 = vsyncpa %s421, 1

// kernel: gcn_forward.1
$region0: #{gcn_forward.1}
  #allocation0 [shape = 'u32[]', space=smem, size = 0x4, offset = 0x4, fixed_abs, tag = 'smem constant byte address 0x4 - core index']
  #allocation1 [shape = 'u32[144,128]{1,0:T(1,128)}', space=vmem, size = 0x12000, scoped, tag = 'internal scratch']
  #allocation2 [shape = 'f32[8,64]{1,0:T(8,128)}', space=vmem, size = 0x1000, scoped, tag = 'scratch operand']
  %s0 = inlined_call_operand.vmem [shape: f32[2,4,16,16], index: 0, kind: input, shape index: {}]
  %s1 = inlined_call_operand.vmem [shape: f32[64,128], index: 1, kind: input, shape index: {}]
  %s2 = inlined_call_operand.vmem [shape: f32[1,128], index: 2, kind: input, shape index: {}]
  %s3 = inlined_call_operand.hbm [shape: f32[2,8,16,16], index: 3, kind: output, shape index: {}]
  %s4 = sld [smem:[#allocation0]]
  $region83: #{gcn_forward.1} parent=0
    _
  %s6 = ssub.s32 1, %s4
  %s7 = scalar_select 0, %s6, %s4
  $region1: #{gcn_forward.1} parent=0
    #allocation3 [shape = 'u8[32768]{0}', space=vmem, size = 0x8000, scoped, tag = 'input window, operand 0']
    #allocation4 [shape = 'u8[65536]{0}', space=vmem, size = 0x10000, scoped, tag = 'output window, operand 0']
    #allocation5 [shape = 's32[2]{0}', space=sflag, size = 0x8, scoped, tag = 'scoped memory for gcn_forward.1']
    %8 = vsyncpa [#allocation5], 0
    %s9 = scalar_lea.sflag [#allocation5], 1
    %10 = vsyncpa %s9, 0
    loop: start=0, step=1, limit=6
    $region2: #{gcn_forward.1} parent=1 // loop_pre_header
      _
    $region3: #{gcn_forward.1} parent=1 // loop_header
      %s12 = sphi 0, %s16
      %p13 = scmp.ge.s32.totalorder %s12, 6
      %s19 = sphi 0, %s31
      %s20 = sphi 0, %s27
      %s21 = sphi 0, %s19
      %s22 = sphi 0, %s20
      %s23 = sphi 0, %s21
      %s24 = sphi 0, %s22
      %s36 = sphi 0, %s38
      %s39 = sphi 0, %s36
      %s40 = sphi 0, %s39
      %s56 = sphi 0, %s40
      %s60 = sphi 0, %s60
      %s62 = sphi 0, %s60
      %s63 = sphi 0, %s62
      %s77 = sphi 0, %s63
      %s81 = sphi 0, %s81
      %s83 = sphi 0, %s81
      %s84 = sphi 0, %s83
      %s98 = sphi 0, %s84
      %s106 = sphi 0, %s108
      %s109 = sphi 0, %s106
      %s110 = sphi 0, %s109
      %s126 = sphi 0, %s110
    $region4: #{gcn_forward.1} parent=1 // loop_header_branch
      %15 = sbr.rel (%p13) target = $region8
    $region5: #{gcn_forward.1} parent=1 // loop_body
      %s17 = ssub.s32 %s12, 1
      %s18 = ssub.s32 %s12, 2
      %s25 = sadd.s32 1, %s20
      %p26 = scmp.ge.s32.totalorder %s25, 2
      %s27 = scalar_select %p26, 0, %s25
      %s28 = sadd.s32 1, %s19
      %s29 = scalar_select %p26, %s28, %s19
      %p30 = scmp.ge.s32.totalorder %s29, 2
      %s31 = scalar_select %p30, 0, %s29
      %s32 = ssub.s32 %s19, %s31
      %s33 = ssub.s32 %s20, %s27
      %s34 = sor.u32 %s32, %s33
      %p35 = scmp.eq.s32.totalorder %s34, 0
      %s37 = sadd.s32 %s36, 1
      %s38 = scalar_select %p35, %s36, %s37
      %p41 = pneg %p35
      %p42 = scmp.eq.s32.totalorder %s12, 3
      %p43 = por %p41, %p42
      %p44 = scmp.ne.s32.totalorder %s36, %s39
      %p45 = scmp.eq.s32.totalorder %s12, 0
      %p46 = por %p44, %p45
      %p47 = scmp.ne.s32.totalorder %s36, %s39
      %p48 = scmp.eq.s32.totalorder %s17, 3
      %p49 = por %p47, %p48
      %p50 = scmp.ne.s32.totalorder %s39, %s40
      %p51 = scmp.eq.s32.totalorder %s17, 0
      %p52 = por %p50, %p51
      %p53 = scmp.ne.s32.totalorder %s39, %s40
      %p54 = scmp.eq.s32.totalorder %s18, 3
      %p55 = por %p53, %p54
      %p57 = scmp.ne.s32.totalorder %s40, %s56
      %p58 = scmp.eq.s32.totalorder %s18, 0
      %p59 = por %p57, %p58
      %s61 = sadd.s32 %s60, 1
      %p64 = scmp.eq.s32.totalorder %s12, 3
      %p65 = scmp.ne.s32.totalorder %s60, %s62
      %p66 = scmp.eq.s32.totalorder %s12, 0
      %p67 = por %p65, %p66
      %p68 = scmp.ne.s32.totalorder %s60, %s62
      %p69 = scmp.eq.s32.totalorder %s17, 3
      %p70 = por %p68, %p69
      %p71 = scmp.ne.s32.totalorder %s62, %s63
      %p72 = scmp.eq.s32.totalorder %s17, 0
      %p73 = por %p71, %p72
      %p74 = scmp.ne.s32.totalorder %s62, %s63
      %p75 = scmp.eq.s32.totalorder %s18, 3
      %p76 = por %p74, %p75
      %p78 = scmp.ne.s32.totalorder %s63, %s77
      %p79 = scmp.eq.s32.totalorder %s18, 0
      %p80 = por %p78, %p79
      %s82 = sadd.s32 %s81, 1
      %p85 = scmp.eq.s32.totalorder %s12, 3
      %p86 = scmp.ne.s32.totalorder %s81, %s83
      %p87 = scmp.eq.s32.totalorder %s12, 0
      %p88 = por %p86, %p87
      %p89 = scmp.ne.s32.totalorder %s81, %s83
      %p90 = scmp.eq.s32.totalorder %s17, 3
      %p91 = por %p89, %p90
      %p92 = scmp.ne.s32.totalorder %s83, %s84
      %p93 = scmp.eq.s32.totalorder %s17, 0
      %p94 = por %p92, %p93
      %p95 = scmp.ne.s32.totalorder %s83, %s84
      %p96 = scmp.eq.s32.totalorder %s18, 3
      %p97 = por %p95, %p96
      %p99 = scmp.ne.s32.totalorder %s84, %s98
      %p100 = scmp.eq.s32.totalorder %s18, 0
      %p101 = por %p99, %p100
      %s102 = ssub.s32 %s19, %s31
      %s103 = ssub.s32 %s20, %s27
      %s104 = sor.u32 %s102, %s103
      %p105 = scmp.eq.s32.totalorder %s104, 0
      %s107 = sadd.s32 %s106, 1
      %s108 = scalar_select %p105, %s106, %s107
      %p111 = pneg %p105
      %p112 = scmp.eq.s32.totalorder %s12, 3
      %p113 = por %p111, %p112
      %p114 = scmp.ne.s32.totalorder %s106, %s109
      %p115 = scmp.eq.s32.totalorder %s12, 0
      %p116 = por %p114, %p115
      %p117 = scmp.ne.s32.totalorder %s106, %s109
      %p118 = scmp.eq.s32.totalorder %s17, 3
      %p119 = por %p117, %p118
      %p120 = scmp.ne.s32.totalorder %s109, %s110
      %p121 = scmp.eq.s32.totalorder %s17, 0
      %p122 = por %p120, %p121
      %p123 = scmp.ne.s32.totalorder %s109, %s110
      %p124 = scmp.eq.s32.totalorder %s18, 3
      %p125 = por %p123, %p124
      %p127 = scmp.ne.s32.totalorder %s110, %s126
      %p128 = scmp.eq.s32.totalorder %s18, 0
      %p129 = por %p127, %p128
      %p130 = scmp.le.s32.totalorder 1, %s12
      %p131 = scmp.lt.s32.totalorder %s12, 5
      %p132 = pnand %p130, %p131
      %p133 = pneg %p132
      // Predicated region
      $region9: #{gcn_forward.1} parent=5 // pred_check
        _
      $region10: #{gcn_forward.1} parent=5 // pred_check_branch
        %135 = sbr.rel (%p132) target = $region12
      $region11: #{gcn_forward.1} parent=5 // pred_region
        %s136 = ssub.s32 %s12, 1
        // Predicated region
        $region13: #{gcn_forward.1} parent=11 // pred_check
          %p137 = pneg %p73
        $region14: #{gcn_forward.1} parent=11 // pred_check_branch
          %139 = sbr.rel (%p137) target = $region16
        $region15: #{gcn_forward.1} parent=11 // pred_region
          _
        $region16: #{gcn_forward.1} parent=11 // pred_fallthru
          _
        // Predicated region
        $region17: #{gcn_forward.1} parent=11 // pred_check
          %p140 = pneg %p94
        $region18: #{gcn_forward.1} parent=11 // pred_check_branch
          %142 = sbr.rel (%p140) target = $region20
        $region19: #{gcn_forward.1} parent=11 // pred_region
          _
        $region20: #{gcn_forward.1} parent=11 // pred_fallthru
          _
      $region12: #{gcn_forward.1} parent=5 // pred_fallthru
        _
      %p143 = scmp.lt.s32.totalorder %s12, 4
      // Predicated region
      $region21: #{gcn_forward.1} parent=5 // pred_check
        %p144 = pneg %p143
      $region22: #{gcn_forward.1} parent=5 // pred_check_branch
        %146 = sbr.rel (%p144) target = $region24
      $region23: #{gcn_forward.1} parent=5 // pred_region
        // Predicated region
        $region25: #{gcn_forward.1} parent=23 // pred_check
          %p147 = pneg %p46
        $region26: #{gcn_forward.1} parent=23 // pred_check_branch
          %149 = sbr.rel (%p147) target = $region28
        $region27: #{gcn_forward.1} parent=23 // pred_region
          %s150 = sand.u32 %s36, 1
          %s151 = sand.u32 %s36, 1
          %s152 = smul.addr %s151, 32
          %s153 = scalar_lea.vmem [#allocation3], %s152
          %s154 = smul.addr %s19, 8
          %s155 = sadd.s32 %s20, %s154
          %s156 = smul.addr %s155, 8
          %s157 = scalar_lea.vmem %s0, %s156
          // Predicated region
          $region29: #{gcn_forward.1} parent=27 // pred_check
            _
          $region30: #{gcn_forward.1} parent=27 // pred_check_branch
            %159 = sbr.rel (0) target = $region32
          $region31: #{gcn_forward.1} parent=27 // pred_region
            // Predicated region
            $region33: #{gcn_forward.1} parent=31 // pred_check
              _
            $region34: #{gcn_forward.1} parent=31 // pred_check_branch
              %161 = sbr.rel (0) target = $region36
            $region35: #{gcn_forward.1} parent=31 // pred_region
              // Predicated region
              $region48: #{gcn_forward.1} parent=35 // pred_check
                _
              $region49: #{gcn_forward.1} parent=35 // pred_check_branch
                %182 = sbr.rel (0) target = $region51
              $region50: #{gcn_forward.1} parent=35 // pred_region
                loop: start=0, step=1, limit=1
                $region52: #{gcn_forward.1} parent=50 // loop_pre_header
                  _
                $region53: #{gcn_forward.1} parent=50 // loop_header
                  %s184 = sphi 0, %s188
                  %p185 = scmp.ge.s32.totalorder %s184, 1
                  %s189 = sphi %s157, %s157
                  %s190 = sphi %s153, %s153
                $region54: #{gcn_forward.1} parent=50 // loop_header_branch
                  %187 = sbr.rel (%p185) target = $region58
                $region55: #{gcn_forward.1} parent=50 // loop_body
                  %v191 = vld [vmem:[%s189] sm:$0xff]
                  %192 = vst [vmem:[%s190] sm:$0xff] %v191
                  %v193 = vld [vmem:[%s189 + $0x10] sm:$0xff]
                  %194 = vst [vmem:[%s190 + $0x8] sm:$0xff] %v193
                  %v195 = vld [vmem:[%s189 + $0x20] sm:$0xff]
                  %196 = vst [vmem:[%s190 + $0x10] sm:$0xff] %v195
                  %v197 = vld [vmem:[%s189 + $0x30] sm:$0xff]
                  %198 = vst [vmem:[%s190 + $0x18] sm:$0xff] %v197
                $region56: #{gcn_forward.1} parent=50 // loop_footer
                  %s188 = sadd.s32 1, %s184
                $region57: #{gcn_forward.1} parent=50 // loop_footer_branch
                  %183 = sbr.rel target = $region53
                $region58: #{gcn_forward.1} parent=50 // loop_exit
                  _
              $region51: #{gcn_forward.1} parent=35 // pred_fallthru
                _
              // Predicated region
              $region59: #{gcn_forward.1} parent=35 // pred_check
                _
              $region60: #{gcn_forward.1} parent=35 // pred_check_branch
                %200 = sbr.rel target = $region62
              $region61: #{gcn_forward.1} parent=35 // pred_region
                _
              $region62: #{gcn_forward.1} parent=35 // pred_fallthru
                _
            $region36: #{gcn_forward.1} parent=31 // pred_fallthru
              _
            // Predicated region
            $region37: #{gcn_forward.1} parent=31 // pred_check
              _
            $region38: #{gcn_forward.1} parent=31 // pred_check_branch
              %163 = sbr.rel target = $region40
            $region39: #{gcn_forward.1} parent=31 // pred_region
              loop: start=0, step=1, limit=1
              $region41: #{gcn_forward.1} parent=39 // loop_pre_header
                _
              $region42: #{gcn_forward.1} parent=39 // loop_header
                %s166 = sphi 0, %s170
                %p167 = scmp.ge.s32.totalorder %s166, 1
                %s171 = sphi %s157, %s157
                %s172 = sphi %s153, %s153
              $region43: #{gcn_forward.1} parent=39 // loop_header_branch
                %169 = sbr.rel (%p167) target = $region47
              $region44: #{gcn_forward.1} parent=39 // loop_body
                %v173 = vld [vmem:[%s171] sm:$0xff]
                %174 = vst [vmem:[%s172] sm:$0xff] %v173
                %v175 = vld [vmem:[%s171 + $0x10] sm:$0xff]
                %176 = vst [vmem:[%s172 + $0x8] sm:$0xff] %v175
                %v177 = vld [vmem:[%s171 + $0x20] sm:$0xff]
                %178 = vst [vmem:[%s172 + $0x10] sm:$0xff] %v177
                %v179 = vld [vmem:[%s171 + $0x30] sm:$0xff]
                %180 = vst [vmem:[%s172 + $0x18] sm:$0xff] %v179
              $region45: #{gcn_forward.1} parent=39 // loop_footer
                %s170 = sadd.s32 1, %s166
              $region46: #{gcn_forward.1} parent=39 // loop_footer_branch
                %165 = sbr.rel target = $region42
              $region47: #{gcn_forward.1} parent=39 // loop_exit
                _
            $region40: #{gcn_forward.1} parent=31 // pred_fallthru
              _
          $region32: #{gcn_forward.1} parent=27 // pred_fallthru
            _
          %201 = vnop
        $region28: #{gcn_forward.1} parent=23 // pred_fallthru
          _
      $region24: #{gcn_forward.1} parent=5 // pred_fallthru
        _
      %p202 = scmp.le.s32.totalorder 1, %s12
      %p203 = scmp.lt.s32.totalorder %s12, 5
      %p204 = pnand %p202, %p203
      %p205 = pneg %p204
      // Predicated region
      $region63: #{gcn_forward.1} parent=5 // pred_check
        _
      $region64: #{gcn_forward.1} parent=5 // pred_check_branch
        %207 = sbr.rel (%p204) target = $region66
      $region65: #{gcn_forward.1} parent=5 // pred_region
        %s208 = ssub.s32 %s12, 1
        %s209 = sand.u32 %s39, 1
        %s210 = sand.u32 %s39, 1
        %s211 = smul.addr %s210, 32
        %s212 = scalar_lea.vmem [#allocation3], %s211
        // Predicated region
        $region67: #{gcn_forward.1} parent=65 // pred_check
          %p213 = pneg %p52
        $region68: #{gcn_forward.1} parent=65 // pred_check_branch
          %215 = sbr.rel (%p213) target = $region70
        $region69: #{gcn_forward.1} parent=65 // pred_region
          _
        $region70: #{gcn_forward.1} parent=65 // pred_fallthru
          _
        %s216 = sand.u32 %s39, 1
        %s217 = sand.u32 %s39, 1
        %s218 = smul.addr %s217, 32
        %s219 = scalar_lea.vmem [#allocation3], %s218
        %p220 = pneg %p52
        %p221 = pneg %p49
        %p222 = pneg %p73
        %p223 = pneg %p70
        %p224 = pneg %p94
        %p225 = pneg %p91
        %p226 = pneg %p122
        %p227 = pneg %p119
        %s228 = sand.u32 %s109, 1
        %s229 = scalar_lea.sflag [#allocation5], %s228
        %s230 = sand.u32 %s109, 1
        %s231 = smul.addr %s230, 64
        %s232 = scalar_lea.vmem [#allocation4], %s231
        %v233 = vld [vmem:[%s212] sm:$0xff]
        %vm234 = vcmask 130048
        %235 = vst.msk [vmem:[#allocation2] sm:$0xff] %vm234, %v233
        %s236 = scalar_lea.vmem %s212, 8 [#allocation3]
        %v237 = vld [vmem:[%s236] sm:$0xff]
        %239 = vrot.lane.b32.xlu0 %v237, 16
        %v240 = vpop.permute.xlu0 %239
        %vm242 = vcmask 261248
        %243 = vst.msk [vmem:[#allocation2] sm:$0xff] %vm242, %v240
        %s244 = scalar_lea.vmem %s212, 16 [#allocation3]
        %v245 = vld [vmem:[%s244] sm:$0xff]
        %247 = vrot.lane.b32.xlu0 %v245, 32
        %v248 = vpop.permute.xlu0 %247
        %vm250 = vcmask 392448
        %251 = vst.msk [vmem:[#allocation2] sm:$0xff] %vm250, %v248
        %s252 = scalar_lea.vmem %s212, 24 [#allocation3]
        %v253 = vld [vmem:[%s252] sm:$0xff]
        %255 = vrot.lane.b32.xlu0 %v253, 48
        %v256 = vpop.permute.xlu0 %255
        %vm258 = vcmask 523648
        %259 = vst.msk [vmem:[#allocation2] sm:$0xff] %vm258, %v256
        %v260 = vld [vmem:[#allocation2] sm:$0xff]
        %v261 = vld [vmem:[%s1] sm:$0xff]
        %v262 = vld [vmem:[%s1 + $0x8] sm:$0xff]
        %v263 = vld [vmem:[%s1 + $0x10] sm:$0xff]
        %v264 = vld [vmem:[%s1 + $0x18] sm:$0xff]
        %v265 = vld [vmem:[%s1 + $0x20] sm:$0xff]
        %v266 = vld [vmem:[%s1 + $0x28] sm:$0xff]
        %v267 = vld [vmem:[%s1 + $0x30] sm:$0xff]
        %v268 = vld [vmem:[%s1 + $0x38] sm:$0xff]
        %v269 = vld [vmem:[%s2] sm:$0x1]
        %v271 = vlaneseq
        %v272 = vshrl.u32 %v271, 7
        %v273 = vsub.s32 0, %v272
        %v274 = vrot.slane %v269, %v273
        %vm276 = vcmask 523264
        %v278 = vsel %vm276, %v260, 0
        %280 = vmatprep.subr.mxu0 0.0
        %281 = vmatpush1.msra.mxu0 %v261
        %282 = vmatprep.subr.mxu0 0.0
        %283 = vmatpush1.msra.mxu0 %v262
        %284 = vmatprep.subr.mxu0 0.0
        %285 = vmatpush1.msra.mxu0 %v263
        %286 = vmatprep.subr.mxu0 0.0
        %287 = vmatpush1.msra.mxu0 %v264
        %288 = vmatprep.subr.mxu0 0.0
        %289 = vmatpush1.msra.mxu0 %v265
        %290 = vmatprep.subr.mxu0 0.0
        %291 = vmatpush1.msra.mxu0 %v266
        %292 = vmatprep.subr.mxu0 0.0
        %293 = vmatpush1.msra.mxu0 %v267
        %294 = vmatprep.subr.mxu0 0.0
        %295 = vmatpush1.msra.mxu0 %v268
        %296 = vmatprep.subr.mxu0 0.0
        %297 = vmatpush1.msra.mxu0 0.0
        %298 = vmatprep.subr.mxu0 0.0
        %299 = vmatpush1.msra.mxu0 0.0
        %300 = vmatprep.subr.mxu0 0.0
        %301 = vmatpush1.msra.mxu0 0.0
        %302 = vmatprep.subr.mxu0 0.0
        %303 = vmatpush1.msra.mxu0 0.0
        %304 = vmatprep.subr.mxu0 0.0
        %305 = vmatpush1.msra.mxu0 0.0
        %306 = vmatprep.subr.mxu0 0.0
        %307 = vmatpush1.msra.mxu0 0.0
        %308 = vmatprep.subr.mxu0 0.0
        %309 = vmatpush1.msra.mxu0 0.0
        %310 = vmatprep.subr.mxu0 0.0
        %311 = vmatpush1.msra.mxu0 0.0
        %312 = vmatprep.subr.mxu0 0.0
        %313 = vmatpush1.msra.mxu0 0.0
        %314 = vmatprep.subr.mxu0 0.0
        %315 = vmatpush1.msra.mxu0 0.0
        %316 = vmatprep.subr.mxu0 0.0
        %317 = vmatpush1.msra.mxu0 0.0
        %318 = vmatprep.subr.mxu0 0.0
        %319 = vmatpush1.msra.mxu0 0.0
        %320 = vmatprep.subr.mxu0 0.0
        %321 = vmatpush1.msra.mxu0 0.0
        %322 = vmatprep.subr.mxu0 0.0
        %323 = vmatpush1.msra.mxu0 0.0
        %324 = vmatprep.subr.mxu0 0.0
        %325 = vmatpush1.msra.mxu0 0.0
        %326 = vmatprep.subr.mxu0 0.0
        %327 = vmatpush1.msra.mxu0 0.0
        %328 = vmatprep.subr.mxu0 0.0
        %329 = vmatpush1.msra.mxu0 0.0
        %330 = vmatprep.subr.mxu0 0.0
        %331 = vmatpush1.msra.mxu0 0.0
        %332 = vmatprep.subr.mxu0 0.0
        %333 = vmatpush1.msra.mxu0 0.0
        %334 = vmatprep.subr.mxu0 0.0
        %335 = vmatpush1.msra.mxu0 0.0
        %336 = vmatprep.subr.mxu0 0.0
        %337 = vmatpush1.msra.mxu0 0.0
        %338 = vmatprep.subr.mxu0 0.0
        %339 = vmatpush1.msra.mxu0 0.0
        %340 = vmatprep.subr.mxu0 0.0
        %341 = vmatpush1.msra.mxu0 0.0
        %342 = vmatprep.subr.mxu0 0.0
        %343 = vmatpush1.msra.mxu0 0.0
        %344 = vmatprep.mubr.f32.mxu0 0.0
        %345 = vmatmul.mubr.f32.gmra.mrb[0].mxu0 %v278
        %v346 = vpop.f32.mrb[0].mxu0
        %v347 = vadd.f32 %v274, %v346
        %v348 = vpop.f32.mrb[0].mxu0
        %349 = vdwg.mxu0
        %350 = vst.msk [vmem:[%s232] sm:$0xff] %vm234, %v347
        %352 = vrot.lane.b32.xlu0 %v347, 112
        %v353 = vpop.permute.xlu0 %352
        %s355 = scalar_lea.vmem %s232, 8 [#allocation4]
        %356 = vst.msk [vmem:[%s355] sm:$0xff] %vm234, %v353
        %357 = vrot.lane.b32.xlu0 %v347, 96
        %v358 = vpop.permute.xlu0 %357
        %s360 = scalar_lea.vmem %s232, 16 [#allocation4]
        %361 = vst.msk [vmem:[%s360] sm:$0xff] %vm234, %v358
        %362 = vrot.lane.b32.xlu0 %v347, 80
        %v363 = vpop.permute.xlu0 %362
        %s365 = scalar_lea.vmem %s232, 24 [#allocation4]
        %366 = vst.msk [vmem:[%s365] sm:$0xff] %vm234, %v363
        %367 = vrot.lane.b32.xlu0 %v347, 64
        %v368 = vpop.permute.xlu0 %367
        %s370 = scalar_lea.vmem %s232, 32 [#allocation4]
        %371 = vst.msk [vmem:[%s370] sm:$0xff] %vm234, %v368
        %372 = vrot.lane.b32.xlu0 %v347, 48
        %v373 = vpop.permute.xlu0 %372
        %s375 = scalar_lea.vmem %s232, 40 [#allocation4]
        %376 = vst.msk [vmem:[%s375] sm:$0xff] %vm234, %v373
        %377 = vrot.lane.b32.xlu0 %v347, 32
        %v378 = vpop.permute.xlu0 %377
        %s380 = scalar_lea.vmem %s232, 48 [#allocation4]
        %381 = vst.msk [vmem:[%s380] sm:$0xff] %vm234, %v378
        %382 = vrot.lane.b32.xlu0 %v347, 16
        %v383 = vpop.permute.xlu0 %382
        %s385 = scalar_lea.vmem %s232, 56 [#allocation4]
        %386 = vst.msk [vmem:[%s385] sm:$0xff] %vm234, %v383
        %s387 = sand.u32 %s109, 1
        %s388 = scalar_lea.sflag [#allocation5], %s387
        %s389 = sand.u32 %s109, 1
        %s390 = smul.addr %s389, 64
        %s391 = scalar_lea.vmem [#allocation4], %s390
        // Predicated region
        $region71: #{gcn_forward.1} parent=65 // pred_check
          %p392 = pneg %p119
        $region72: #{gcn_forward.1} parent=65 // pred_check_branch
          %394 = sbr.rel (%p392) target = $region74
        $region73: #{gcn_forward.1} parent=65 // pred_region
          %s396 = ssub.s32 1024, 1024
          %397 = vsyncadd %s388, %s396
          %s398 = smul.addr %s21, 16
          %s399 = sadd.s32 %s22, %s398
          %s400 = smul.addr %s399, 128
          %s401 = scalar_lea.hbm %s3, %s400
          %s402 = sshll.u32 %s391, 4
          %s403 = int_to_ptr.vmem [resolvable:$true] %s402
          %408 = dma.vmem_to_hbm [thread:$0]  %s403, 1024, %s401, %s388, 128, 256, 8
        $region74: #{gcn_forward.1} parent=65 // pred_fallthru
          _
      $region66: #{gcn_forward.1} parent=5 // pred_fallthru
        _
      %p409 = scmp.le.s32.totalorder 2, %s12
      // Predicated region
      $region75: #{gcn_forward.1} parent=5 // pred_check
        %p410 = pneg %p409
      $region76: #{gcn_forward.1} parent=5 // pred_check_branch
        %412 = sbr.rel (%p410) target = $region78
      $region77: #{gcn_forward.1} parent=5 // pred_region
        %s413 = ssub.s32 %s12, 2
        // Predicated region
        $region79: #{gcn_forward.1} parent=77 // pred_check
          %p414 = pneg %p125
        $region80: #{gcn_forward.1} parent=77 // pred_check_branch
          %416 = sbr.rel (%p414) target = $region82
        $region81: #{gcn_forward.1} parent=77 // pred_region
          %s417 = sand.u32 %s110, 1
          %s418 = scalar_lea.sflag [#allocation5], %s417
          %s419 = sand.u32 %s110, 1
          %s420 = smul.addr %s419, 64
          %s421 = scalar_lea.vmem [#allocation4], %s420
          %422 = dma.done %s418, 1024
        $region82: #{gcn_forward.1} parent=77 // pred_fallthru
          _
      $region78: #{gcn_forward.1} parent=5 // pred_fallthru
        _
    $region6: #{gcn_forward.1} parent=1 // loop_footer
      %s16 = sadd.s32 1, %s12
    $region7: #{gcn_forward.1} parent=1 // loop_footer_branch
      %11 = sbr.rel target = $region3
    $region8: #{gcn_forward.1} parent=1 // loop_exit
      _
    %423 = vsyncpa [#allocation5], 1
    %s424 = scalar_lea.sflag [#allocation5], 1
    %425 = vsyncpa %s424, 1

</llo_original>
